<compile_context>
chip_gen: v7x
topology: tpu7x:2x2x1
jax: 0.10.0
libtpu: 0.0.40
codegen_flags: <defaults>
</compile_context>

<pallas_src>
import functools
import math

import jax
import jax.numpy as jnp
from jax.experimental import pallas as pl
from jax.experimental.pallas import tpu as pltpu


def _round_up(x: int, m: int) -> int:
    return ((x + m - 1) // m) * m


def _largest_tile(total: int, unit: int, cap: int) -> int:
    """Largest multiple of `unit` that exactly divides `total` and is <= cap."""
    best = unit
    d = unit
    limit = min(total, cap)
    while d <= limit:
        if total % d == 0:
            best = d
        d += unit
    return best


def _residual_linear_kernel(x_ref, wt_ref, b_ref, o_ref, *, tn):
    """One (tm, tn) output tile of: out = x @ W.T + b + x.

    x_ref  : [tm, Hp]  full contraction-dim row block of x (resident across j)
    wt_ref : [Hp, tn]  pre-transposed weight block (W.T) — no in-kernel transpose
    b_ref  : [1,  tn]  bias slice (f32)
    """
    j = pl.program_id(1)
    col = pl.multiple_of(j * tn, 128)          # aligned view, no VMEM copy / XLU

    # MXU matmul with f32 accumulation.
    y = jnp.dot(x_ref[...], wt_ref[...], preferred_element_type=jnp.float32)

    # f32 epilogue: bias + residual (sliced from the resident x block).
    xres = x_ref[:, pl.ds(col, tn)].astype(jnp.float32)
    o_ref[...] = (y + b_ref[...] + xres).astype(o_ref.dtype)


def residual_linear(x, w, b, *, tm_max=256, tn_max=256, use_bf16_matmul=False):
    """Fused residual Linear:  out = F.linear(x, w, b) + x.

    x: [..., H]  (arbitrary leading dims, feature axis last — lane axis)
    w: [H, H]    (torch nn.Linear.weight layout: [out_features, in_features])
    b: [H]
    """
    orig_shape = x.shape
    H = orig_shape[-1]
    M = math.prod(orig_shape[:-1]) if len(orig_shape) > 1 else 1

    # Small-shape fallback: padding H < 128 up to a lane tile leaves >50% of
    # every vreg/MXU pass idle and call overhead dominates — let XLA fuse it.
    if H < 128 or M < 8:
        return (jnp.matmul(x, w.T) + b + x).astype(x.dtype)

    x2 = x.reshape(M, H)

    # ---- tile selection (no over-padding) -----------------------------------
    Hp = _round_up(H, 128)                              # lane / contraction axis
    tn = _largest_tile(Hp, 128, max(128, (tn_max // 128) * 128))

    Mp = _round_up(M, 8)                                # sublane / row axis
    tm = _largest_tile(Mp, 8, max(8, (tm_max // 8) * 8))
    if tm <= 16 and Mp // tm > 32:
        # Degenerate (near-prime) Mp/8: accept < tm rows of padding instead of
        # dozens of tiny grid steps.
        tm = max(8, (min(tm_max, 256) // 8) * 8)
        Mp = _round_up(M, tm)

    in_dtype = jnp.bfloat16 if use_bf16_matmul else x.dtype
    out_dtype = x.dtype

    # ---- one-time layout plumbing (skipped when already aligned) ------------
    # TODO(synk): hoist the weight transpose/pad/cast to parameter-load time so
    # it is not re-done per forward call.
    x_pad = x2.astype(in_dtype)
    if Mp != M or Hp != H:
        x_pad = jnp.pad(x_pad, ((0, Mp - M), (0, Hp - H)))
    wt_pad = w.T.astype(in_dtype)
    if Hp != H:
        wt_pad = jnp.pad(wt_pad, ((0, Hp - H), (0, Hp - H)))
    b_pad = b.astype(jnp.float32)
    if Hp != H:
        b_pad = jnp.pad(b_pad, (0, Hp - H))
    b_pad = b_pad.reshape(1, Hp)

    grid = (Mp // tm, Hp // tn)

    # ---- VMEM budget & cost hint ---------------------------------------------
    isz = jnp.dtype(in_dtype).itemsize
    osz = jnp.dtype(out_dtype).itemsize
    block_bytes = 2 * (tm * Hp * isz + Hp * tn * isz + tn * 4 + tm * tn * osz)
    vmem_limit = int(min(64 << 20, max(32 << 20, int(block_bytes * 1.5))))

    cost = pl.CostEstimate(
        flops=2 * Mp * Hp * Hp + 2 * Mp * Hp,
        transcendentals=0,
        bytes_accessed=(
            Mp * Hp * isz                      # x read once (resident across j)
            + (Mp // tm) * Hp * Hp * isz       # W.T re-streamed per row block
            + (Mp // tm) * Hp * 4              # bias
            + Mp * Hp * osz                    # output write
        ),
    )

    kernel = functools.partial(_residual_linear_kernel, tn=tn)

    out_pad = pl.pallas_call(
        kernel,
        out_shape=jax.ShapeDtypeStruct((Mp, Hp), out_dtype),
        grid_spec=pltpu.PrefetchScalarGridSpec(
            num_scalar_prefetch=0,
            grid=grid,
            in_specs=[
                pl.BlockSpec((tm, Hp), lambda i, j: (i, 0)),   # x full-K row block
                pl.BlockSpec((Hp, tn), lambda i, j: (0, j)),   # W.T column block
                pl.BlockSpec((1, tn), lambda i, j: (0, j)),    # bias slice
            ],
            out_specs=pl.BlockSpec((tm, tn), lambda i, j: (i, j)),
        ),
        compiler_params=pltpu.CompilerParams(
            dimension_semantics=("parallel", "parallel"),
            vmem_limit_bytes=vmem_limit,
        ),
        cost_estimate=cost,
    )(x_pad, wt_pad, b_pad)

    if Mp != M or Hp != H:
        out_pad = out_pad[:M, :H]
    return out_pad.reshape(orig_shape)


if __name__ == "__main__":
    key = jax.random.PRNGKey(0)
    ks = jax.random.split(key, 9)

    # Primary small shape: [batch, seq, hidden] with a lane-aligned hidden so
    # the Pallas path (not the small-shape fallback) is exercised.
    batch, seq, hidden = 2, 8, 128
    x = jax.random.normal(ks[0], (batch, seq, hidden), dtype=jnp.float32)
    w = jax.random.normal(ks[1], (hidden, hidden), dtype=jnp.float32) * 0.02
    b = jax.random.normal(ks[2], (hidden,), dtype=jnp.float32) * 0.02

    out = residual_linear(x, w, b)
    jax.block_until_ready(out)
    ref = x @ w.T + b + x
    assert out.shape == x.shape
    assert jnp.allclose(out, ref, atol=1e-5, rtol=1e-5), "mismatch (primary)"

    # Padded + multi-tile grid path (M=300 -> 304 rows, H=200 -> 256 lanes).
    b2_, s2_, h2_ = 3, 100, 200
    x2 = jax.random.normal(ks[3], (b2_, s2_, h2_), dtype=jnp.float32)
    w2 = jax.random.normal(ks[4], (h2_, h2_), dtype=jnp.float32) * 0.02
    b2 = jax.random.normal(ks[5], (h2_,), dtype=jnp.float32) * 0.02
    out2 = residual_linear(x2, w2, b2, tm_max=128, tn_max=128)
    jax.block_until_ready(out2)
    ref2 = x2 @ w2.T + b2 + x2
    assert out2.shape == x2.shape
    assert jnp.allclose(out2, ref2, atol=1e-4, rtol=1e-4), "mismatch (tiled)"

    # bf16-operand path (wrapper-side cast, f32 accumulation/epilogue).
    out3 = residual_linear(x2, w2, b2, use_bf16_matmul=True)
    jax.block_until_ready(out3)
    assert out3.shape == x2.shape
    assert jnp.allclose(out3, ref2, atol=5e-2, rtol=5e-2), "mismatch (bf16)"

    # Tiny-hidden fallback path (hidden=32 < one lane tile -> plain XLA fusion).
    xs = jax.random.normal(ks[6], (2, 8, 32), dtype=jnp.float32)
    ws = jax.random.normal(ks[7], (32, 32), dtype=jnp.float32) * 0.02
    bs = jax.random.normal(ks[8], (32,), dtype=jnp.float32) * 0.02
    outs = residual_linear(xs, ws, bs)
    jax.block_until_ready(outs)
    assert jnp.allclose(outs, xs @ ws.T + bs + xs, atol=1e-5, rtol=1e-5), "mismatch (fallback)"

    print("KERNEL_OK")
</pallas_src>

<mosaic_0001>
module attributes {stable_mosaic.version = 11 : i64} {
  func.func @_residual_linear_kernel(%arg0: i32, %arg1: i32, %arg2: memref<16x128xf32, #tpu.memory_space<vmem>>, %arg3: memref<128x128xf32, #tpu.memory_space<vmem>>, %arg4: memref<1x128xf32, #tpu.memory_space<vmem>>, %arg5: memref<16x128xf32, #tpu.memory_space<vmem>>) attributes {dimension_semantics = [#tpu.dimension_semantics<parallel>, #tpu.dimension_semantics<parallel>], iteration_bounds = array<i64: 1, 1>, scalar_prefetch = 0 : i64, scratch_operands = 0 : i64, tpu.core_type = #tpu.core_type<tc>, window_params = [{transform_indices = @transform_0, window_bounds = array<i64: 16, 128>}, {transform_indices = @transform_1, window_bounds = array<i64: 128, 128>}, {transform_indices = @transform_2, window_bounds = array<i64: 1, 128>}, {transform_indices = @transform_3, window_bounds = array<i64: 16, 128>}]} {
    %c128_i32 = arith.constant 128 : i32
    %0 = arith.muli %arg1, %c128_i32 : i32
    %1 = tpu.assume_multiple %0, 128 : i32
    %c0 = arith.constant 0 : index
    %c0_0 = arith.constant 0 : index
    %2 = vector.load %arg2[%c0, %c0_0] : memref<16x128xf32, #tpu.memory_space<vmem>>, vector<16x128xf32>
    %c0_1 = arith.constant 0 : index
    %c0_2 = arith.constant 0 : index
    %3 = vector.load %arg3[%c0_1, %c0_2] : memref<128x128xf32, #tpu.memory_space<vmem>>, vector<128x128xf32>
    %cst = arith.constant dense<0.000000e+00> : vector<16x128xf32>
    %4 = tpu.matmul %2, %3, %cst {dimension_numbers = #tpu.dot_dimension_numbers<[1], [0], [0], [1], [0, 0, 1, 1], [], []>} : vector<16x128xf32>, vector<128x128xf32>, vector<16x128xf32> -> vector<16x128xf32>
    %c0_3 = arith.constant 0 : index
    %5 = arith.index_cast %1 : i32 to index
    %6 = vector.load %arg2[%c0_3, %5] : memref<16x128xf32, #tpu.memory_space<vmem>>, vector<16x128xf32>
    %c0_4 = arith.constant 0 : index
    %c0_5 = arith.constant 0 : index
    %7 = vector.load %arg4[%c0_4, %c0_5] : memref<1x128xf32, #tpu.memory_space<vmem>>, vector<1x128xf32>
    %8 = vector.broadcast %7 : vector<1x128xf32> to vector<16x128xf32>
    %9 = arith.addf %4, %8 : vector<16x128xf32>
    %10 = arith.addf %9, %6 : vector<16x128xf32>
    %c0_6 = arith.constant 0 : index
    %c0_7 = arith.constant 0 : index
    %11 = vector.load %arg5[%c0_6, %c0_7] : memref<16x128xf32, #tpu.memory_space<vmem>>, vector<16x128xf32>
    tpu.vector_store %arg5[%c0_6, %c0_7], %10 {strides = array<i32>} : memref<16x128xf32, #tpu.memory_space<vmem>>, vector<16x128xf32>,
    return
  }
  func.func @transform_0(%arg0: i32, %arg1: i32) -> (i32, i32) {
    %c0_i32 = arith.constant 0 : i32
    %c0_i32_0 = arith.constant 0 : i32
    return %arg0, %c0_i32 : i32, i32
  }
  func.func @transform_1(%arg0: i32, %arg1: i32) -> (i32, i32) {
    %c0_i32 = arith.constant 0 : i32
    %c0_i32_0 = arith.constant 0 : i32
    return %c0_i32, %arg1 : i32, i32
  }
  func.func @transform_2(%arg0: i32, %arg1: i32) -> (i32, i32) {
    %c0_i32 = arith.constant 0 : i32
    %c0_i32_0 = arith.constant 0 : i32
    return %c0_i32, %arg1 : i32, i32
  }
  func.func @transform_3(%arg0: i32, %arg1: i32) -> (i32, i32) {
    %c0_i32 = arith.constant 0 : i32
    return %arg0, %arg1 : i32, i32
  }
}

</mosaic_0001>

<llo_original>
// kernel: tpu_custom_call.1
$region0: #{tpu_custom_call.1}
  #allocation0 [shape = 'u32[]', space=smem, size = 0x4, offset = 0x4, fixed_abs, tag = 'smem constant byte address 0x4 - core index']
  #allocation1 [shape = 'u32[144,128]{1,0:T(1,128)}', space=vmem, size = 0x12000, scoped, tag = 'internal scratch']
  %s0 = inlined_call_operand.hbm [shape: f32[16,128], index: 0, kind: input, shape index: {}]
  %s1 = inlined_call_operand.hbm [shape: f32[128,128], index: 1, kind: input, shape index: {}]
  %s2 = inlined_call_operand.vmem [shape: f32[1,128], index: 2, kind: input, shape index: {}]
  %s3 = inlined_call_operand.hbm [shape: f32[16,128], index: 3, kind: output, shape index: {}]
  %s4 = sld [smem:[#allocation0]]
  $region30: #{tpu_custom_call.1} parent=0
    _
  %s6 = ssub.s32 1, %s4
  %s7 = scalar_select 0, %s6, %s4
  $region1: #{tpu_custom_call.1} parent=0
    #allocation2 [shape = 'u8[8192]{0}', space=vmem, size = 0x2000, scoped, tag = 'input window, operand 0, single buffered']
    #allocation3 [shape = 's32[1]{0}', space=sflag, size = 0x4, scoped, tag = 'scoped memory for tpu_custom_call.1']
    #allocation4 [shape = 's32[1]{0}', space=sflag, size = 0x4, scoped, tag = 'scoped memory for tpu_custom_call.1']
    #allocation5 [shape = 'u8[65536]{0}', space=vmem, size = 0x10000, scoped, tag = 'input window, operand 1, single buffered']
    #allocation6 [shape = 's32[1]{0}', space=sflag, size = 0x4, scoped, tag = 'scoped memory for tpu_custom_call.1']
    #allocation7 [shape = 'u8[8192]{0}', space=vmem, size = 0x2000, scoped, tag = 'output window, operand 0, single buffered']
    %8 = vsyncpa [#allocation3], 0
    %9 = vsyncpa [#allocation6], 0
    %10 = vsyncpa [#allocation4], 0
    // Predicated region
    $region2: #{tpu_custom_call.1} parent=1 // pred_check
      _
    $region3: #{tpu_custom_call.1} parent=1 // pred_check_branch
      %12 = sbr.rel (0) target = $region5
    $region4: #{tpu_custom_call.1} parent=1 // pred_region
      %s14 = ssub.s32 256, 256
      %15 = vsyncadd [#allocation3], %s14
      %s16 = sshll.u32 [#allocation2], 4
      %s17 = int_to_ptr.vmem [resolvable:$true] %s16
      %22 = dma.hbm_to_vmem [thread:$0]  %s0, 256, %s17, [#allocation3], 128, 128, 8
    $region5: #{tpu_custom_call.1} parent=1 // pred_fallthru
      _
    // Predicated region
    $region6: #{tpu_custom_call.1} parent=1 // pred_check
      _
    $region7: #{tpu_custom_call.1} parent=1 // pred_check_branch
      %24 = sbr.rel (0) target = $region9
    $region8: #{tpu_custom_call.1} parent=1 // pred_region
      %s26 = ssub.s32 2048, 2048
      %27 = vsyncadd [#allocation6], %s26
      %s28 = sshll.u32 [#allocation5], 4
      %s29 = int_to_ptr.vmem [resolvable:$true] %s28
      %34 = dma.hbm_to_vmem [thread:$0]  %s1, 2048, %s29, [#allocation6], 128, 128, 8
    $region9: #{tpu_custom_call.1} parent=1 // pred_fallthru
      _
    // Predicated region
    $region10: #{tpu_custom_call.1} parent=1 // pred_check
      _
    $region11: #{tpu_custom_call.1} parent=1 // pred_check_branch
      %36 = sbr.rel (0) target = $region13
    $region12: #{tpu_custom_call.1} parent=1 // pred_region
      _
    $region13: #{tpu_custom_call.1} parent=1 // pred_fallthru
      _
    // Predicated region
    $region14: #{tpu_custom_call.1} parent=1 // pred_check
      _
    $region15: #{tpu_custom_call.1} parent=1 // pred_check_branch
      %38 = sbr.rel (0) target = $region17
    $region16: #{tpu_custom_call.1} parent=1 // pred_region
      %39 = dma.done [#allocation3], 256
    $region17: #{tpu_custom_call.1} parent=1 // pred_fallthru
      _
    // Predicated region
    $region18: #{tpu_custom_call.1} parent=1 // pred_check
      _
    $region19: #{tpu_custom_call.1} parent=1 // pred_check_branch
      %41 = sbr.rel (0) target = $region21
    $region20: #{tpu_custom_call.1} parent=1 // pred_region
      %42 = dma.done [#allocation6], 2048
    $region21: #{tpu_custom_call.1} parent=1 // pred_fallthru
      _
    %s43 = smul.u32 0, 128
    %v44 = vld [vmem:[#allocation2] sm:$0xff]
    %v45 = vld [vmem:[#allocation2 + $0x8] sm:$0xff]
    %v46 = vld [vmem:[#allocation5] sm:$0xff]
    %v47 = vld [vmem:[#allocation5 + $0x8] sm:$0xff]
    %v48 = vld [vmem:[#allocation5 + $0x10] sm:$0xff]
    %v49 = vld [vmem:[#allocation5 + $0x18] sm:$0xff]
    %v50 = vld [vmem:[#allocation5 + $0x20] sm:$0xff]
    %v51 = vld [vmem:[#allocation5 + $0x28] sm:$0xff]
    %v52 = vld [vmem:[#allocation5 + $0x30] sm:$0xff]
    %v53 = vld [vmem:[#allocation5 + $0x38] sm:$0xff]
    %v54 = vld [vmem:[#allocation5 + $0x40] sm:$0xff]
    %v55 = vld [vmem:[#allocation5 + $0x48] sm:$0xff]
    %v56 = vld [vmem:[#allocation5 + $0x50] sm:$0xff]
    %v57 = vld [vmem:[#allocation5 + $0x58] sm:$0xff]
    %v58 = vld [vmem:[#allocation5 + $0x60] sm:$0xff]
    %v59 = vld [vmem:[#allocation5 + $0x68] sm:$0xff]
    %v60 = vld [vmem:[#allocation5 + $0x70] sm:$0xff]
    %v61 = vld [vmem:[#allocation5 + $0x78] sm:$0xff]
    %s62 = sshra.s32 %s43, 7
    %s63 = sand.u32 %s43, 127
    %s64 = scalar_lea.vmem [#allocation2], %s62
    %v65 = vld [vmem:[%s64] sm:$0xff]
    %v66 = vld [vmem:[%s64 + $0x8] sm:$0xff]
    %v67 = vld [vmem:[%s2] sm:$0x1]
    %v69 = vlaneseq
    %v70 = vshrl.u32 %v69, 7
    %v71 = vsub.s32 0, %v70
    %v72 = vrot.slane %v67, %v71
    %74 = vmatprep.subr.mxu0 0.0
    %75 = vmatpush1.msra.mxu0 %v46
    %76 = vmatprep.subr.mxu0 0.0
    %77 = vmatpush1.msra.mxu0 %v47
    %78 = vmatprep.subr.mxu0 0.0
    %79 = vmatpush1.msra.mxu0 %v48
    %80 = vmatprep.subr.mxu0 0.0
    %81 = vmatpush1.msra.mxu0 %v49
    %82 = vmatprep.subr.mxu0 0.0
    %83 = vmatpush1.msra.mxu0 %v50
    %84 = vmatprep.subr.mxu0 0.0
    %85 = vmatpush1.msra.mxu0 %v51
    %86 = vmatprep.subr.mxu0 0.0
    %87 = vmatpush1.msra.mxu0 %v52
    %88 = vmatprep.subr.mxu0 0.0
    %89 = vmatpush1.msra.mxu0 %v53
    %90 = vmatprep.subr.mxu0 0.0
    %91 = vmatpush1.msra.mxu0 %v54
    %92 = vmatprep.subr.mxu0 0.0
    %93 = vmatpush1.msra.mxu0 %v55
    %94 = vmatprep.subr.mxu0 0.0
    %95 = vmatpush1.msra.mxu0 %v56
    %96 = vmatprep.subr.mxu0 0.0
    %97 = vmatpush1.msra.mxu0 %v57
    %98 = vmatprep.subr.mxu0 0.0
    %99 = vmatpush1.msra.mxu0 %v58
    %100 = vmatprep.subr.mxu0 0.0
    %101 = vmatpush1.msra.mxu0 %v59
    %102 = vmatprep.subr.mxu0 0.0
    %103 = vmatpush1.msra.mxu0 %v60
    %104 = vmatprep.subr.mxu0 0.0
    %105 = vmatpush1.msra.mxu0 %v61
    %106 = vmatprep.subr.mxu0 0.0
    %107 = vmatpush1.msra.mxu0 0.0
    %108 = vmatprep.subr.mxu0 0.0
    %109 = vmatpush1.msra.mxu0 0.0
    %110 = vmatprep.subr.mxu0 0.0
    %111 = vmatpush1.msra.mxu0 0.0
    %112 = vmatprep.subr.mxu0 0.0
    %113 = vmatpush1.msra.mxu0 0.0
    %114 = vmatprep.subr.mxu0 0.0
    %115 = vmatpush1.msra.mxu0 0.0
    %116 = vmatprep.subr.mxu0 0.0
    %117 = vmatpush1.msra.mxu0 0.0
    %118 = vmatprep.subr.mxu0 0.0
    %119 = vmatpush1.msra.mxu0 0.0
    %120 = vmatprep.subr.mxu0 0.0
    %121 = vmatpush1.msra.mxu0 0.0
    %122 = vmatprep.subr.mxu0 0.0
    %123 = vmatpush1.msra.mxu0 0.0
    %124 = vmatprep.subr.mxu0 0.0
    %125 = vmatpush1.msra.mxu0 0.0
    %126 = vmatprep.subr.mxu0 0.0
    %127 = vmatpush1.msra.mxu0 0.0
    %128 = vmatprep.subr.mxu0 0.0
    %129 = vmatpush1.msra.mxu0 0.0
    %130 = vmatprep.subr.mxu0 0.0
    %131 = vmatpush1.msra.mxu0 0.0
    %132 = vmatprep.subr.mxu0 0.0
    %133 = vmatpush1.msra.mxu0 0.0
    %134 = vmatprep.subr.mxu0 0.0
    %135 = vmatpush1.msra.mxu0 0.0
    %136 = vmatprep.subr.mxu0 0.0
    %137 = vmatpush1.msra.mxu0 0.0
    %138 = vmatprep.mubr.f32.mxu0 0.0
    %139 = vmatmul.mubr.f32.gmra.mrb[0].mxu0 %v44
    %v140 = vpop.f32.mrb[0].mxu0
    %v141 = vadd.f32 %v72, %v140
    %v142 = vpop.f32.mrb[0].mxu0
    %143 = vmatprep.mubr.f32.mxu0 0.0
    %144 = vmatmul.mubr.f32.gmra.mrb[0].mxu0 %v45
    %v145 = vpop.f32.mrb[0].mxu0
    %v146 = vadd.f32 %v72, %v145
    %v147 = vpop.f32.mrb[0].mxu0
    %148 = vdwg.mxu0
    %v149 = vadd.f32 %v141, %v65
    %v150 = vadd.f32 %v146, %v66
    %151 = vst [vmem:[#allocation7] sm:$0xff] %v149
    %152 = vst [vmem:[#allocation7 + $0x8] sm:$0xff] %v150
    // Predicated region
    $region22: #{tpu_custom_call.1} parent=1 // pred_check
      _
    $region23: #{tpu_custom_call.1} parent=1 // pred_check_branch
      %154 = sbr.rel (0) target = $region25
    $region24: #{tpu_custom_call.1} parent=1 // pred_region
      %s156 = ssub.s32 256, 256
      %157 = vsyncadd [#allocation4], %s156
      %s158 = sshll.u32 [#allocation7], 4
      %s159 = int_to_ptr.vmem [resolvable:$true] %s158
      %164 = dma.vmem_to_hbm [thread:$0]  %s159, 256, %s3, [#allocation4], 128, 128, 8
    $region25: #{tpu_custom_call.1} parent=1 // pred_fallthru
      _
    // Predicated region
    $region26: #{tpu_custom_call.1} parent=1 // pred_check
      _
    $region27: #{tpu_custom_call.1} parent=1 // pred_check_branch
      %166 = sbr.rel (0) target = $region29
    $region28: #{tpu_custom_call.1} parent=1 // pred_region
      %167 = dma.done [#allocation4], 256
    $region29: #{tpu_custom_call.1} parent=1 // pred_fallthru
      _
    %168 = vsyncpa [#allocation3], 1
    %169 = vsyncpa [#allocation6], 1
    %170 = vsyncpa [#allocation4], 1

</llo_original>
